<compile_context>
chip_gen: v7x
topology: tpu7x:2x2x1
jax: 0.10.0
libtpu: 0.0.40
codegen_flags: <defaults>
</compile_context>

<pallas_src>
import jax
import jax.numpy as jnp
from jax.experimental import pallas as pl
from jax.experimental.pallas import tpu as pltpu


def _stochastic_depth_kernel(x_ref, s_ref, o_ref):
    """x_ref: (TILE_B, TILE_N) input tile, s_ref: (TILE_B, 1) f32 per-row scale,
    o_ref: (TILE_B, TILE_N) output tile. Pure broadcast multiply."""
    o_ref[...] = (x_ref[...].astype(jnp.float32) * s_ref[...]).astype(o_ref.dtype)


def _round_up(a: int, m: int) -> int:
    return ((a + m - 1) // m) * m


def stochastic_depth(x, key, survival_prob=0.8, training=True):
    """Stochastic depth on an NCHW tensor.

    x            : (B, C, H, W) array
    key          : jax.random key used for the per-sample Bernoulli draw
    survival_prob: keep probability p; kept samples are scaled by 1/p
    training     : eval mode is an identity
    """
    if not training:
        return x
    if survival_prob <= 0.0:
        raise ValueError("survival_prob must be > 0 in training mode")

    B, C, H, W = x.shape
    N = C * H * W
    itemsize = jnp.dtype(x.dtype).itemsize
    tile_b = {4: 8, 2: 16, 1: 32}.get(itemsize, 8)  # dtype-native sublane height

    # One uniform draw per sample (matches torch.rand(B,1,1,1) < p), turned
    # into a per-sample scale: 1/p if kept, 0 if dropped.
    u = jax.random.uniform(key, (B,), dtype=jnp.float32)
    scale = jnp.where(u < jnp.float32(survival_prob),
                      jnp.float32(1.0 / survival_prob),
                      jnp.float32(0.0))

    # Flatten each sample to a lane-dense row and pad to tile boundaries.
    flat = x.reshape(B, N)
    TILE_N_MAX = 16384  # 8 x 16384 f32 = 512 KiB / buffer; safe for v7x VMEM
    n_pad128 = _round_up(N, 128)
    if n_pad128 <= TILE_N_MAX:
        tile_n = n_pad128
        n_padded = n_pad128
    else:
        tile_n = TILE_N_MAX
        n_padded = _round_up(N, tile_n)
    b_padded = _round_up(B, tile_b)

    flat_p = jnp.pad(flat, ((0, b_padded - B), (0, n_padded - N)))
    scale_p = jnp.pad(scale, (0, b_padded - B)).reshape(b_padded, 1)

    grid = (b_padded // tile_b, n_padded // tile_n)

    out = pl.pallas_call(
        _stochastic_depth_kernel,
        out_shape=jax.ShapeDtypeStruct((b_padded, n_padded), x.dtype),
        grid=grid,
        in_specs=[
            pl.BlockSpec((tile_b, tile_n), lambda i, j: (i, j)),
            pl.BlockSpec((tile_b, 1), lambda i, j: (i, 0)),
        ],
        out_specs=pl.BlockSpec((tile_b, tile_n), lambda i, j: (i, j)),
        compiler_params=pltpu.CompilerParams(
            dimension_semantics=("parallel", "arbitrary")),
        cost_estimate=pl.CostEstimate(
            flops=b_padded * n_padded,
            transcendentals=0,
            bytes_accessed=2 * b_padded * n_padded * itemsize),
        input_output_aliases={0: 0},  # donate the (padded) activation buffer
    )(flat_p, scale_p)

    return out[:B, :N].reshape(B, C, H, W)


if __name__ == "__main__":
    import numpy as np

    data_key = jax.random.PRNGKey(0)
    drop_key = jax.random.PRNGKey(42)

    B, C, H, W = 2, 4, 16, 16
    x = jax.random.normal(data_key, (B, C, H, W), dtype=jnp.float32)
    p = 0.8

    out = stochastic_depth(x, drop_key, survival_prob=p, training=True)
    out = jax.block_until_ready(out)

    # Sanity: each sample is either exactly zero or exactly x / p.
    out_np = np.asarray(out)
    x_np = np.asarray(x)
    for b in range(B):
        dropped = np.allclose(out_np[b], 0.0)
        kept = np.allclose(out_np[b], x_np[b] / p, rtol=1e-6, atol=1e-6)
        assert dropped or kept, f"sample {b}: not a valid stochastic-depth output"

    # Eval mode must be identity.
    out_eval = jax.block_until_ready(
        stochastic_depth(x, drop_key, survival_prob=p, training=False))
    assert np.allclose(np.asarray(out_eval), x_np)

    print("KERNEL_OK")
</pallas_src>

<mosaic_0001>
module attributes {stable_mosaic.version = 11 : i64} {
  func.func @_stochastic_depth_kernel(%arg0: i32, %arg1: i32, %arg2: memref<8x1024xf32, #tpu.memory_space<vmem>>, %arg3: memref<8x1xf32, #tpu.memory_space<vmem>>, %arg4: memref<8x1024xf32, #tpu.memory_space<vmem>>) attributes {dimension_semantics = [#tpu.dimension_semantics<parallel>, #tpu.dimension_semantics<arbitrary>], iteration_bounds = array<i64: 1, 1>, scalar_prefetch = 0 : i64, scratch_operands = 0 : i64, tpu.core_type = #tpu.core_type<tc>, window_params = [{transform_indices = @transform_0, window_bounds = array<i64: 8, 1024>}, {transform_indices = @transform_1, window_bounds = array<i64: 8, 1>}, {transform_indices = @transform_2, window_bounds = array<i64: 8, 1024>}]} {
    %c0 = arith.constant 0 : index
    %c0_0 = arith.constant 0 : index
    %0 = vector.load %arg2[%c0, %c0_0] : memref<8x1024xf32, #tpu.memory_space<vmem>>, vector<8x1024xf32>
    %c0_1 = arith.constant 0 : index
    %c0_2 = arith.constant 0 : index
    %1 = vector.load %arg3[%c0_1, %c0_2] : memref<8x1xf32, #tpu.memory_space<vmem>>, vector<8x1xf32>
    %2 = vector.broadcast %1 : vector<8x1xf32> to vector<8x1024xf32>
    %3 = arith.mulf %0, %2 : vector<8x1024xf32>
    %c0_3 = arith.constant 0 : index
    %c0_4 = arith.constant 0 : index
    %4 = vector.load %arg4[%c0_3, %c0_4] : memref<8x1024xf32, #tpu.memory_space<vmem>>, vector<8x1024xf32>
    tpu.vector_store %arg4[%c0_3, %c0_4], %3 {strides = array<i32>} : memref<8x1024xf32, #tpu.memory_space<vmem>>, vector<8x1024xf32>,
    return
  }
  func.func @transform_0(%arg0: i32, %arg1: i32) -> (i32, i32) {
    %c0_i32 = arith.constant 0 : i32
    return %arg0, %arg1 : i32, i32
  }
  func.func @transform_1(%arg0: i32, %arg1: i32) -> (i32, i32) {
    %c0_i32 = arith.constant 0 : i32
    %c0_i32_0 = arith.constant 0 : i32
    return %arg0, %c0_i32 : i32, i32
  }
  func.func @transform_2(%arg0: i32, %arg1: i32) -> (i32, i32) {
    %c0_i32 = arith.constant 0 : i32
    return %arg0, %arg1 : i32, i32
  }
}

</mosaic_0001>

<llo_original>
// kernel: tpu_custom_call.1
$region0: #{tpu_custom_call.1}
  #allocation0 [shape = 'u32[]', space=smem, size = 0x4, offset = 0x4, fixed_abs, tag = 'smem constant byte address 0x4 - core index']
  #allocation1 [shape = 'u32[144,128]{1,0:T(1,128)}', space=vmem, size = 0x12000, scoped, tag = 'internal scratch']
  %s0 = inlined_call_operand.hbm [shape: f32[8,1024], index: 0, kind: input, shape index: {}, may-alias: {0,2}]
  %s1 = inlined_call_operand.vmem [shape: f32[8,1], index: 1, kind: input, shape index: {}]
  %s2 = inlined_call_operand.hbm [shape: f32[8,1024], index: 2, kind: output, shape index: {}, may-alias: {0,2}]
  %s3 = sld [smem:[#allocation0]]
  $region22: #{tpu_custom_call.1} parent=0
    _
  %s5 = ssub.s32 1, %s3
  %s6 = scalar_select 0, %s5, %s3
  $region1: #{tpu_custom_call.1} parent=0
    #allocation2 [shape = 'u8[32768]{0}', space=vmem, size = 0x8000, scoped, tag = 'input window, operand 0, single buffered']
    #allocation3 [shape = 's32[1]{0}', space=sflag, size = 0x4, scoped, tag = 'scoped memory for tpu_custom_call.1']
    #allocation4 [shape = 's32[1]{0}', space=sflag, size = 0x4, scoped, tag = 'scoped memory for tpu_custom_call.1']
    #allocation5 [shape = 'u8[32768]{0}', space=vmem, size = 0x8000, scoped, tag = 'output window, operand 0, single buffered']
    %7 = vsyncpa [#allocation3], 0
    %8 = vsyncpa [#allocation4], 0
    // Predicated region
    $region2: #{tpu_custom_call.1} parent=1 // pred_check
      _
    $region3: #{tpu_custom_call.1} parent=1 // pred_check_branch
      %10 = sbr.rel (0) target = $region5
    $region4: #{tpu_custom_call.1} parent=1 // pred_region
      %s12 = ssub.s32 1024, 1024
      %13 = vsyncadd [#allocation3], %s12
      %s15 = sshll.u32 [#allocation2], 4
      %s16 = int_to_ptr.vmem [resolvable:$true] %s15
      %18 = dma.hbm_to_vmem [thread:$0]  %s0, 1024, %s16, [#allocation3]
    $region5: #{tpu_custom_call.1} parent=1 // pred_fallthru
      _
    // Predicated region
    $region6: #{tpu_custom_call.1} parent=1 // pred_check
      _
    $region7: #{tpu_custom_call.1} parent=1 // pred_check_branch
      %20 = sbr.rel (0) target = $region9
    $region8: #{tpu_custom_call.1} parent=1 // pred_region
      _
    $region9: #{tpu_custom_call.1} parent=1 // pred_fallthru
      _
    // Predicated region
    $region10: #{tpu_custom_call.1} parent=1 // pred_check
      _
    $region11: #{tpu_custom_call.1} parent=1 // pred_check_branch
      %22 = sbr.rel (0) target = $region13
    $region12: #{tpu_custom_call.1} parent=1 // pred_region
      %23 = dma.done [#allocation3], 1024
    $region13: #{tpu_custom_call.1} parent=1 // pred_fallthru
      _
    %v24 = vld [vmem:[#allocation2] sm:$0xff]
    %v25 = vld [vmem:[#allocation2 + $0x8] sm:$0xff]
    %v26 = vld [vmem:[#allocation2 + $0x10] sm:$0xff]
    %v27 = vld [vmem:[#allocation2 + $0x18] sm:$0xff]
    %v28 = vld [vmem:[#allocation2 + $0x20] sm:$0xff]
    %v29 = vld [vmem:[#allocation2 + $0x28] sm:$0xff]
    %v30 = vld [vmem:[#allocation2 + $0x30] sm:$0xff]
    %v31 = vld [vmem:[#allocation2 + $0x38] sm:$0xff]
    %v32 = vld [vmem:[%s1] sm:$0xff]
    %34 = vset.pattern.permute.xlu0 0
    %35 = vperm.xlu0 %34, %v32
    %v36 = vpop.permute.xlu0 %35
    %v38 = vmul.f32 %v24, %v36
    %v39 = vmul.f32 %v25, %v36
    %v40 = vmul.f32 %v26, %v36
    %v41 = vmul.f32 %v27, %v36
    %v42 = vmul.f32 %v28, %v36
    %v43 = vmul.f32 %v29, %v36
    %v44 = vmul.f32 %v30, %v36
    %v45 = vmul.f32 %v31, %v36
    %46 = vst [vmem:[#allocation5] sm:$0xff] %v38
    %47 = vst [vmem:[#allocation5 + $0x8] sm:$0xff] %v39
    %48 = vst [vmem:[#allocation5 + $0x10] sm:$0xff] %v40
    %49 = vst [vmem:[#allocation5 + $0x18] sm:$0xff] %v41
    %50 = vst [vmem:[#allocation5 + $0x20] sm:$0xff] %v42
    %51 = vst [vmem:[#allocation5 + $0x28] sm:$0xff] %v43
    %52 = vst [vmem:[#allocation5 + $0x30] sm:$0xff] %v44
    %53 = vst [vmem:[#allocation5 + $0x38] sm:$0xff] %v45
    // Predicated region
    $region14: #{tpu_custom_call.1} parent=1 // pred_check
      _
    $region15: #{tpu_custom_call.1} parent=1 // pred_check_branch
      %55 = sbr.rel (0) target = $region17
    $region16: #{tpu_custom_call.1} parent=1 // pred_region
      %s57 = ssub.s32 1024, 1024
      %58 = vsyncadd [#allocation4], %s57
      %s60 = sshll.u32 [#allocation5], 4
      %s61 = int_to_ptr.vmem [resolvable:$true] %s60
      %63 = dma.vmem_to_hbm [thread:$0]  %s61, 1024, %s2, [#allocation4]
    $region17: #{tpu_custom_call.1} parent=1 // pred_fallthru
      _
    // Predicated region
    $region18: #{tpu_custom_call.1} parent=1 // pred_check
      _
    $region19: #{tpu_custom_call.1} parent=1 // pred_check_branch
      %65 = sbr.rel (0) target = $region21
    $region20: #{tpu_custom_call.1} parent=1 // pred_region
      %66 = dma.done [#allocation4], 1024
    $region21: #{tpu_custom_call.1} parent=1 // pred_fallthru
      _
    %67 = vsyncpa [#allocation3], 1
    %68 = vsyncpa [#allocation4], 1

</llo_original>
